<compile_context>
chip_gen: v5e
topology: v5e:2x2
jax: 0.10.0
libtpu: 0.0.40
codegen_flags: <defaults>
</compile_context>

<pallas_src>
import functools
import math

import jax
import jax.numpy as jnp
from jax.experimental import pallas as pl
from jax.experimental.pallas import tpu as pltpu

_LANE = 128      # lane width (last dim granularity)
_SUBLANE = 8     # f32 sublane granularity (second-to-last dim)


def _round_up(n, m):
    return ((n + m - 1) // m) * m


def _fused_mlp_kernel(*refs, num_layers):
    """o = relu(... relu(relu(x@W0+b0)@W1+b1) ... @W_{L-1}+b_{L-1}).

    refs = (x_ref, w0_ref, b0_ref, w1_ref, b1_ref, ..., o_ref)
      x_ref: (TM, D0p)  bf16
      w_l  : (D_l p, D_{l+1} p)  bf16
      b_l  : (8, D_{l+1} p)      f32  (bias replicated across the sublane tile)
      o_ref: (TM, DLp)           f32
    Intermediate activations never touch HBM; matmuls accumulate in f32 on the
    MXU, bias-add + ReLU stay in f32 (v5e VPU/EUP have no bf16 path).
    """
    x_ref = refs[0]
    o_ref = refs[-1]
    wb = refs[1:-1]

    h = x_ref[...]
    for l in range(num_layers):
        w_ref = wb[2 * l]
        b_ref = wb[2 * l + 1]
        acc = jnp.dot(h.astype(jnp.bfloat16), w_ref[...],
                      preferred_element_type=jnp.float32)
        acc = acc + b_ref[0:1, :]        # f32 bias, broadcast over batch rows
        h = jnp.maximum(acc, 0.0)        # F.relu on every layer (incl. last)
    o_ref[...] = h.astype(o_ref.dtype)


def _vmem_capacity_bytes():
    try:
        return int(pltpu.get_tpu_info().vmem_capacity_bytes)
    except Exception:
        return 64 << 20   # conservative default (v7x per-TC VMEM)


def _fused_mlp_call(x_pad, padded_params, out_dim_pad, tm):
    """x_pad: (B_pad, D0p) bf16; padded_params: [(Wt bf16 (Dinp,Doutp), b f32 (8,Doutp))]."""
    b_pad, d0_pad = x_pad.shape
    grid = (pl.cdiv(b_pad, tm),)   # ragged last tile allowed; padded rows are discarded

    in_specs = [pl.BlockSpec((tm, d0_pad), lambda i: (i, 0))]
    args = [x_pad]
    const_bytes = 0
    for w_t, b in padded_params:
        # Constant block index + single buffer: weights/biases stay VMEM-resident
        # across grid steps with no double-buffer waste.
        in_specs.append(pl.BlockSpec(w_t.shape, lambda i: (0, 0),
                                     pipeline_mode=pl.Buffered(1)))
        in_specs.append(pl.BlockSpec(b.shape, lambda i: (0, 0),
                                     pipeline_mode=pl.Buffered(1)))
        args.append(w_t)
        args.append(b)
        const_bytes += w_t.size * w_t.dtype.itemsize + b.size * b.dtype.itemsize

    # VMEM budget: double-buffered x/out blocks + single-buffered weights/biases
    # + widest live f32 intermediates, plus margin; clamp to physical capacity.
    widest = max([d0_pad, out_dim_pad] + [w.shape[1] for w, _ in padded_params])
    needed = (2 * tm * d0_pad * x_pad.dtype.itemsize     # x blocks (bf16)
              + 2 * tm * out_dim_pad * 4                 # out blocks (f32)
              + const_bytes
              + 2 * tm * widest * 4)                     # live f32 activations
    cap = _vmem_capacity_bytes()
    vmem_limit = int(min(max(needed + (8 << 20), 32 << 20), cap * 0.9))
    # TODO(synk): if const_bytes alone exceeds the budget, stream weight column
    # tiles from HBM (memory_space=pl.ANY + pltpu.emit_pipeline) instead of
    # keeping every layer VMEM-resident (ceiling is ~half on v7x's 64 MiB).

    kernel = functools.partial(_fused_mlp_kernel, num_layers=len(padded_params))
    return pl.pallas_call(
        kernel,
        out_shape=jax.ShapeDtypeStruct((b_pad, out_dim_pad), jnp.float32),
        grid=grid,
        in_specs=in_specs,
        out_specs=pl.BlockSpec((tm, out_dim_pad), lambda i: (i, 0)),
        compiler_params=pltpu.CompilerParams(
            dimension_semantics=("parallel",),   # shard batch tiles across TCs (v7x)
            vmem_limit_bytes=vmem_limit),
    )(*args)


class MLPBaseAEPallas:
    """JAX/Pallas re-implementation of MLPBaseAE with flag='baseline'.

    Parameters are created deterministically in-script (synthetic uniform
    +-1/sqrt(fan_in) init; not a checkpoint load).
    """

    def __init__(self, input_shape, hidden_shapes, key, batch_tile=512):
        in_dim = int(math.prod(input_shape))
        self.in_dim = in_dim
        self.in_dim_pad = _round_up(in_dim, _LANE)
        self.batch_tile = batch_tile

        self.params = []          # unpadded f32 (W (out,in), b (out,)) -- reference math
        self.padded_params = []   # (W.T zero-padded bf16 (Dinp,Doutp), bias f32 (8,Doutp))
        d = in_dim
        for next_shape in hidden_shapes:
            key, kw, kb = jax.random.split(key, 3)
            scale = 1.0 / math.sqrt(d)
            W = jax.random.uniform(kw, (next_shape, d), jnp.float32, -scale, scale)
            b = jax.random.uniform(kb, (next_shape,), jnp.float32, -scale, scale)
            self.params.append((W, b))

            d_pad = _round_up(d, _LANE)
            n_pad = _round_up(next_shape, _LANE)
            w_t_pad = jnp.zeros((d_pad, n_pad), jnp.bfloat16)
            w_t_pad = w_t_pad.at[:d, :next_shape].set(W.T.astype(jnp.bfloat16))
            b_row = jnp.zeros((1, n_pad), jnp.float32).at[0, :next_shape].set(b)
            b_pad = jnp.broadcast_to(b_row, (_SUBLANE, n_pad))   # full (8,128k) tile
            self.padded_params.append((w_t_pad, b_pad))
            d = next_shape

        self.output_shape = d
        self.out_dim_pad = _round_up(d, _LANE)

    def _pick_tm(self, b_pad):
        if b_pad < 16:
            return b_pad                             # tiny batch: single tile
        if b_pad <= 2 * self.batch_tile:
            # >= 2 grid steps so the "parallel" axis can shard across v7x's 2 TCs
            return _round_up(pl.cdiv(b_pad, 2), _SUBLANE)
        return self.batch_tile

    def __call__(self, x):
        B = x.shape[0]
        x2 = x.reshape(B, -1).astype(jnp.bfloat16)   # feed the MXU bf16

        b_pad = _round_up(max(B, _SUBLANE), _SUBLANE)  # sublane alignment only
        tm = self._pick_tm(b_pad)
        # single fusible pad (no zeros+scatter second pass over the input)
        x_pad = jnp.pad(x2, ((0, b_pad - B), (0, self.in_dim_pad - self.in_dim)))

        out_pad = _fused_mlp_call(x_pad, self.padded_params, self.out_dim_pad, tm)
        return out_pad[:B, :self.output_shape]

    def reference(self, x):
        """Plain-JAX reference with identical bf16 weight/activation rounding."""
        B = x.shape[0]
        out = x.reshape(B, -1).astype(jnp.float32)
        for W, b in self.params:
            out = jnp.dot(out.astype(jnp.bfloat16), W.T.astype(jnp.bfloat16),
                          preferred_element_type=jnp.float32) + b
            out = jnp.maximum(out, 0.0)
        return out


if __name__ == "__main__":
    key = jax.random.PRNGKey(0)
    key, kmodel, kx = jax.random.split(key, 3)

    # Small shapes consistent with the module's baseline path:
    #   input_shape = (24,) -> flattened 24, hidden_shapes = [32, 32], batch = 2
    input_shape = (24,)
    hidden_shapes = [32, 32]
    batch = 2

    model = MLPBaseAEPallas(input_shape, hidden_shapes, kmodel)

    x = jax.random.normal(kx, (batch,) + input_shape, dtype=jnp.float32)

    out = jax.block_until_ready(model(x))
    ref = jax.block_until_ready(model.reference(x))

    # correctness: shape, ReLU non-negativity, match vs plain-JAX reference
    assert out.shape == (batch, hidden_shapes[-1])
    assert bool(jnp.all(out >= 0.0))
    assert bool(jnp.allclose(out, ref, rtol=2e-3, atol=2e-3))

    print("KERNEL_OK")
</pallas_src>

<mosaic_0001>
module attributes {stable_mosaic.version = 11 : i64} {
  func.func @_fused_mlp_kernel(%arg0: i32, %arg1: memref<8x128xbf16, #tpu.memory_space<vmem>>, %arg2: memref<128x128xbf16, #tpu.memory_space<vmem>>, %arg3: memref<8x128xf32, #tpu.memory_space<vmem>>, %arg4: memref<128x128xbf16, #tpu.memory_space<vmem>>, %arg5: memref<8x128xf32, #tpu.memory_space<vmem>>, %arg6: memref<8x128xf32, #tpu.memory_space<vmem>>) attributes {dimension_semantics = [#tpu.dimension_semantics<parallel>], iteration_bounds = array<i64: 1>, scalar_prefetch = 0 : i64, scratch_operands = 0 : i64, tpu.core_type = #tpu.core_type<tc>, window_params = [{transform_indices = @transform_0, window_bounds = array<i64: 8, 128>}, {pipeline_mode = #tpu.pipeline_mode<synchronous>, transform_indices = @transform_1, window_bounds = array<i64: 128, 128>}, {pipeline_mode = #tpu.pipeline_mode<synchronous>, transform_indices = @transform_2, window_bounds = array<i64: 8, 128>}, {pipeline_mode = #tpu.pipeline_mode<synchronous>, transform_indices = @transform_3, window_bounds = array<i64: 128, 128>}, {pipeline_mode = #tpu.pipeline_mode<synchronous>, transform_indices = @transform_4, window_bounds = array<i64: 8, 128>}, {transform_indices = @transform_5, window_bounds = array<i64: 8, 128>}]} {
    %c0 = arith.constant 0 : index
    %c0_0 = arith.constant 0 : index
    %0 = vector.load %arg1[%c0, %c0_0] : memref<8x128xbf16, #tpu.memory_space<vmem>>, vector<8x128xbf16>
    %c0_1 = arith.constant 0 : index
    %c0_2 = arith.constant 0 : index
    %1 = vector.load %arg2[%c0_1, %c0_2] : memref<128x128xbf16, #tpu.memory_space<vmem>>, vector<128x128xbf16>
    %cst = arith.constant dense<0.000000e+00> : vector<8x128xf32>
    %2 = tpu.matmul %0, %1, %cst {dimension_numbers = #tpu.dot_dimension_numbers<[1], [0], [0], [1], [0, 0, 1, 1], [], []>} : vector<8x128xbf16>, vector<128x128xbf16>, vector<8x128xf32> -> vector<8x128xf32>
    %c0_3 = arith.constant 0 : index
    %c0_4 = arith.constant 0 : index
    %3 = vector.load %arg3[%c0_3, %c0_4] : memref<8x128xf32, #tpu.memory_space<vmem>>, vector<1x128xf32>
    %4 = vector.broadcast %3 : vector<1x128xf32> to vector<8x128xf32>
    %5 = arith.addf %2, %4 : vector<8x128xf32>
    %cst_5 = arith.constant 0.000000e+00 : f32
    %6 = vector.broadcast %cst_5 : f32 to vector<8x128xf32>
    %7 = arith.maximumf %5, %6 : vector<8x128xf32>
    %8 = arith.truncf %7 : vector<8x128xf32> to vector<8x128xbf16>
    %c0_6 = arith.constant 0 : index
    %c0_7 = arith.constant 0 : index
    %9 = vector.load %arg4[%c0_6, %c0_7] : memref<128x128xbf16, #tpu.memory_space<vmem>>, vector<128x128xbf16>
    %cst_8 = arith.constant dense<0.000000e+00> : vector<8x128xf32>
    %10 = tpu.matmul %8, %9, %cst_8 {dimension_numbers = #tpu.dot_dimension_numbers<[1], [0], [0], [1], [0, 0, 1, 1], [], []>} : vector<8x128xbf16>, vector<128x128xbf16>, vector<8x128xf32> -> vector<8x128xf32>
    %c0_9 = arith.constant 0 : index
    %c0_10 = arith.constant 0 : index
    %11 = vector.load %arg5[%c0_9, %c0_10] : memref<8x128xf32, #tpu.memory_space<vmem>>, vector<1x128xf32>
    %12 = vector.broadcast %11 : vector<1x128xf32> to vector<8x128xf32>
    %13 = arith.addf %10, %12 : vector<8x128xf32>
    %cst_11 = arith.constant 0.000000e+00 : f32
    %14 = vector.broadcast %cst_11 : f32 to vector<8x128xf32>
    %15 = arith.maximumf %13, %14 : vector<8x128xf32>
    %c0_12 = arith.constant 0 : index
    %c0_13 = arith.constant 0 : index
    %16 = vector.load %arg6[%c0_12, %c0_13] : memref<8x128xf32, #tpu.memory_space<vmem>>, vector<8x128xf32>
    tpu.vector_store %arg6[%c0_12, %c0_13], %15 {strides = array<i32>} : memref<8x128xf32, #tpu.memory_space<vmem>>, vector<8x128xf32>,
    return
  }
  func.func @transform_0(%arg0: i32) -> (i32, i32) {
    %c0_i32 = arith.constant 0 : i32
    %c0_i32_0 = arith.constant 0 : i32
    return %arg0, %c0_i32 : i32, i32
  }
  func.func @transform_1(%arg0: i32) -> (i32, i32) {
    %c0_i32 = arith.constant 0 : i32
    %c0_i32_0 = arith.constant 0 : i32
    %c0_i32_1 = arith.constant 0 : i32
    return %c0_i32, %c0_i32_0 : i32, i32
  }
  func.func @transform_2(%arg0: i32) -> (i32, i32) {
    %c0_i32 = arith.constant 0 : i32
    %c0_i32_0 = arith.constant 0 : i32
    %c0_i32_1 = arith.constant 0 : i32
    return %c0_i32, %c0_i32_0 : i32, i32
  }
  func.func @transform_3(%arg0: i32) -> (i32, i32) {
    %c0_i32 = arith.constant 0 : i32
    %c0_i32_0 = arith.constant 0 : i32
    %c0_i32_1 = arith.constant 0 : i32
    return %c0_i32, %c0_i32_0 : i32, i32
  }
  func.func @transform_4(%arg0: i32) -> (i32, i32) {
    %c0_i32 = arith.constant 0 : i32
    %c0_i32_0 = arith.constant 0 : i32
    %c0_i32_1 = arith.constant 0 : i32
    return %c0_i32, %c0_i32_0 : i32, i32
  }
  func.func @transform_5(%arg0: i32) -> (i32, i32) {
    %c0_i32 = arith.constant 0 : i32
    %c0_i32_0 = arith.constant 0 : i32
    return %arg0, %c0_i32 : i32, i32
  }
}

</mosaic_0001>

<llo_original>
// kernel: tpu_custom_call.1
$region0: #{tpu_custom_call.1}
  #allocation0 [shape = 'u32[]', space=smem, size = 0x4, offset = 0x4, fixed_abs, tag = 'smem constant byte address 0x4 - core index']
  #allocation1 [shape = 'u32[72,128]{1,0:T(1,128)}', space=vmem, size = 0x9000, scoped, tag = 'internal scratch']
  %s0 = inlined_call_operand.hbm [shape: bf16[8,128], index: 0, kind: input, shape index: {}]
  %s1 = inlined_call_operand.hbm [shape: bf16[128,128], index: 1, kind: input, shape index: {}]
  %s2 = inlined_call_operand.hbm [shape: f32[8,128], index: 2, kind: input, shape index: {}]
  %s3 = inlined_call_operand.hbm [shape: bf16[128,128], index: 3, kind: input, shape index: {}]
  %s4 = inlined_call_operand.hbm [shape: f32[8,128], index: 4, kind: input, shape index: {}]
  %s5 = inlined_call_operand.hbm [shape: f32[8,128], index: 5, kind: output, shape index: {}]
  %s6 = sld [smem:[#allocation0]]
  $region50: #{tpu_custom_call.1} parent=0
    _
  %s8 = ssub.s32 1, %s6
  %s9 = scalar_select 0, %s8, %s6
  $region1: #{tpu_custom_call.1} parent=0
    #allocation2 [shape = 'u8[2048]{0}', space=vmem, size = 0x800, scoped, tag = 'input window, operand 0, single buffered']
    #allocation3 [shape = 's32[1]{0}', space=sflag, size = 0x4, scoped, tag = 'scoped memory for tpu_custom_call.1']
    #allocation4 [shape = 's32[1]{0}', space=sflag, size = 0x4, scoped, tag = 'scoped memory for tpu_custom_call.1']
    #allocation5 [shape = 'u8[32768]{0}', space=vmem, size = 0x8000, scoped, tag = 'input window, operand 1, single buffered']
    #allocation6 [shape = 's32[1]{0}', space=sflag, size = 0x4, scoped, tag = 'scoped memory for tpu_custom_call.1']
    #allocation7 [shape = 'u8[4096]{0}', space=vmem, size = 0x1000, scoped, tag = 'input window, operand 2, single buffered']
    #allocation8 [shape = 'u8[32768]{0}', space=vmem, size = 0x8000, scoped, tag = 'input window, operand 3, single buffered']
    #allocation9 [shape = 's32[1]{0}', space=sflag, size = 0x4, scoped, tag = 'scoped memory for tpu_custom_call.1']
    #allocation10 [shape = 'u8[4096]{0}', space=vmem, size = 0x1000, scoped, tag = 'input window, operand 4, single buffered']
    #allocation11 [shape = 'u8[4096]{0}', space=vmem, size = 0x1000, scoped, tag = 'output window, operand 0, single buffered']
    %10 = vsyncpa [#allocation3], 0
    %11 = vsyncpa [#allocation6], 0
    %12 = vsyncpa [#allocation9], 0
    %13 = vsyncpa [#allocation4], 0
    // Predicated region
    $region2: #{tpu_custom_call.1} parent=1 // pred_check
      _
    $region3: #{tpu_custom_call.1} parent=1 // pred_check_branch
      %15 = sbr.rel (0) target = $region5
    $region4: #{tpu_custom_call.1} parent=1 // pred_region
      %17 = vsyncadd [#allocation3], 0
      %s19 = sshll.u32 %s0, 4
      %s20 = int_to_ptr.hbm [resolvable:$true] %s19
      %s21 = sshll.u32 [#allocation2], 4
      %s22 = int_to_ptr.vmem [resolvable:$true] %s21
      %24 = dma.hbm_to_vmem [thread:$0]  %s20, 64, %s22, [#allocation3]
    $region5: #{tpu_custom_call.1} parent=1 // pred_fallthru
      _
    // Predicated region
    $region6: #{tpu_custom_call.1} parent=1 // pred_check
      _
    $region7: #{tpu_custom_call.1} parent=1 // pred_check_branch
      %26 = sbr.rel (0) target = $region9
    $region8: #{tpu_custom_call.1} parent=1 // pred_region
      %28 = vsyncadd [#allocation6], 0
      %s29 = sshll.u32 %s1, 4
      %s30 = int_to_ptr.hbm [resolvable:$true] %s29
      %s31 = sshll.u32 [#allocation5], 4
      %s32 = int_to_ptr.vmem [resolvable:$true] %s31
      %37 = dma.hbm_to_vmem [thread:$0]  %s30, 1024, %s32, [#allocation6], 64, 64, 4
    $region9: #{tpu_custom_call.1} parent=1 // pred_fallthru
      _
    // Predicated region
    $region10: #{tpu_custom_call.1} parent=1 // pred_check
      _
    $region11: #{tpu_custom_call.1} parent=1 // pred_check_branch
      %39 = sbr.rel (0) target = $region13
    $region12: #{tpu_custom_call.1} parent=1 // pred_region
      %41 = vsyncadd [#allocation6], 0
      %s43 = sshll.u32 %s2, 4
      %s44 = int_to_ptr.hbm [resolvable:$true] %s43
      %s45 = sshll.u32 [#allocation7], 4
      %s46 = int_to_ptr.vmem [resolvable:$true] %s45
      %48 = dma.hbm_to_vmem [thread:$0]  %s44, 128, %s46, [#allocation6]
    $region13: #{tpu_custom_call.1} parent=1 // pred_fallthru
      _
    // Predicated region
    $region14: #{tpu_custom_call.1} parent=1 // pred_check
      _
    $region15: #{tpu_custom_call.1} parent=1 // pred_check_branch
      %50 = sbr.rel (0) target = $region17
    $region16: #{tpu_custom_call.1} parent=1 // pred_region
      %52 = vsyncadd [#allocation9], 0
      %s53 = sshll.u32 %s3, 4
      %s54 = int_to_ptr.hbm [resolvable:$true] %s53
      %s55 = sshll.u32 [#allocation8], 4
      %s56 = int_to_ptr.vmem [resolvable:$true] %s55
      %61 = dma.hbm_to_vmem [thread:$0]  %s54, 1024, %s56, [#allocation9], 64, 64, 4
    $region17: #{tpu_custom_call.1} parent=1 // pred_fallthru
      _
    // Predicated region
    $region18: #{tpu_custom_call.1} parent=1 // pred_check
      _
    $region19: #{tpu_custom_call.1} parent=1 // pred_check_branch
      %63 = sbr.rel (0) target = $region21
    $region20: #{tpu_custom_call.1} parent=1 // pred_region
      %65 = vsyncadd [#allocation9], 0
      %s67 = sshll.u32 %s4, 4
      %s68 = int_to_ptr.hbm [resolvable:$true] %s67
      %s69 = sshll.u32 [#allocation10], 4
      %s70 = int_to_ptr.vmem [resolvable:$true] %s69
      %72 = dma.hbm_to_vmem [thread:$0]  %s68, 128, %s70, [#allocation9]
    $region21: #{tpu_custom_call.1} parent=1 // pred_fallthru
      _
    // Predicated region
    $region22: #{tpu_custom_call.1} parent=1 // pred_check
      _
    $region23: #{tpu_custom_call.1} parent=1 // pred_check_branch
      %74 = sbr.rel (0) target = $region25
    $region24: #{tpu_custom_call.1} parent=1 // pred_region
      %76 = dma.done [#allocation3], 64
    $region25: #{tpu_custom_call.1} parent=1 // pred_fallthru
      _
    // Predicated region
    $region26: #{tpu_custom_call.1} parent=1 // pred_check
      _
    $region27: #{tpu_custom_call.1} parent=1 // pred_check_branch
      %78 = sbr.rel (0) target = $region29
    $region28: #{tpu_custom_call.1} parent=1 // pred_region
      %80 = dma.done [#allocation6], 1024
    $region29: #{tpu_custom_call.1} parent=1 // pred_fallthru
      _
    // Predicated region
    $region30: #{tpu_custom_call.1} parent=1 // pred_check
      _
    $region31: #{tpu_custom_call.1} parent=1 // pred_check_branch
      %82 = sbr.rel (0) target = $region33
    $region32: #{tpu_custom_call.1} parent=1 // pred_region
      %84 = dma.done [#allocation6], 128
    $region33: #{tpu_custom_call.1} parent=1 // pred_fallthru
      _
    // Predicated region
    $region34: #{tpu_custom_call.1} parent=1 // pred_check
      _
    $region35: #{tpu_custom_call.1} parent=1 // pred_check_branch
      %86 = sbr.rel (0) target = $region37
    $region36: #{tpu_custom_call.1} parent=1 // pred_region
      %88 = dma.done [#allocation9], 1024
    $region37: #{tpu_custom_call.1} parent=1 // pred_fallthru
      _
    // Predicated region
    $region38: #{tpu_custom_call.1} parent=1 // pred_check
      _
    $region39: #{tpu_custom_call.1} parent=1 // pred_check_branch
      %90 = sbr.rel (0) target = $region41
    $region40: #{tpu_custom_call.1} parent=1 // pred_region
      %92 = dma.done [#allocation9], 128
    $region41: #{tpu_custom_call.1} parent=1 // pred_fallthru
      _
    %v93 = vld [vmem:[#allocation2] sm:$0xf]
    %v94 = vld [vmem:[#allocation5] sm:$0xf]
    %v95 = vld [vmem:[#allocation5 + $0x4] sm:$0xf]
    %v96 = vld [vmem:[#allocation5 + $0x8] sm:$0xf]
    %v97 = vld [vmem:[#allocation5 + $0xc] sm:$0xf]
    %v98 = vld [vmem:[#allocation5 + $0x10] sm:$0xf]
    %v99 = vld [vmem:[#allocation5 + $0x14] sm:$0xf]
    %v100 = vld [vmem:[#allocation5 + $0x18] sm:$0xf]
    %v101 = vld [vmem:[#allocation5 + $0x1c] sm:$0xf]
    %v102 = vld [vmem:[#allocation5 + $0x20] sm:$0xf]
    %v103 = vld [vmem:[#allocation5 + $0x24] sm:$0xf]
    %v104 = vld [vmem:[#allocation5 + $0x28] sm:$0xf]
    %v105 = vld [vmem:[#allocation5 + $0x2c] sm:$0xf]
    %v106 = vld [vmem:[#allocation5 + $0x30] sm:$0xf]
    %v107 = vld [vmem:[#allocation5 + $0x34] sm:$0xf]
    %v108 = vld [vmem:[#allocation5 + $0x38] sm:$0xf]
    %v109 = vld [vmem:[#allocation5 + $0x3c] sm:$0xf]
    %v110 = vld [vmem:[#allocation7] sm:$0x1]
    %v111 = vperm.slane %v110, 0
    %v128 = vunpack.c.l.b16 %v94
    %v129 = vunpack.c.l.b16 %v95
    %v130 = vunpack.c.l.b16 %v96
    %v131 = vunpack.c.l.b16 %v97
    %v132 = vunpack.c.l.b16 %v98
    %v133 = vunpack.c.l.b16 %v99
    %v134 = vunpack.c.l.b16 %v100
    %v135 = vunpack.c.l.b16 %v101
    %v136 = vunpack.c.l.b16 %v102
    %v137 = vunpack.c.l.b16 %v103
    %v138 = vunpack.c.l.b16 %v104
    %v139 = vunpack.c.l.b16 %v105
    %v140 = vunpack.c.l.b16 %v106
    %v141 = vunpack.c.l.b16 %v107
    %v142 = vunpack.c.l.b16 %v108
    %v143 = vunpack.c.l.b16 %v109
    %v144 = vpack.c.b16 %v129, %v128
    %v145 = vpack.c.b16 %v131, %v130
    %v146 = vpack.c.b16 %v133, %v132
    %v147 = vpack.c.b16 %v135, %v134
    %v148 = vpack.c.b16 %v137, %v136
    %v149 = vpack.c.b16 %v139, %v138
    %v150 = vpack.c.b16 %v141, %v140
    %v151 = vpack.c.b16 %v143, %v142
    %160 = vmatpush.bf16.msra.mxu0 %v151
    %161 = vmatpush.bf16.msra.mxu0 %v150
    %162 = vmatpush.bf16.msra.mxu0 %v149
    %163 = vmatpush.bf16.msra.mxu0 %v148
    %164 = vmatpush.bf16.msra.mxu0 %v147
    %165 = vmatpush.bf16.msra.mxu0 %v146
    %166 = vmatpush.bf16.msra.mxu0 %v145
    %167 = vmatpush.bf16.msra.mxu0 %v144
    %168 = vmatmul.bf16.gmra.mxu0 %v93
    %v169 = vpop.f32.mrf.mxu0
    %v170 = vadd.f32 %v111, %v169
    %v171 = vpop.f32.mrf.mxu0
    %172 = vdwg.mxu0
    %v173 = vmax.f32 %v170, 0.0
    %v174 = vpack.c.bf16 %v173, %v173
    %v175 = vld [vmem:[#allocation8] sm:$0xf]
    %v176 = vld [vmem:[#allocation8 + $0x4] sm:$0xf]
    %v177 = vld [vmem:[#allocation8 + $0x8] sm:$0xf]
    %v178 = vld [vmem:[#allocation8 + $0xc] sm:$0xf]
    %v179 = vld [vmem:[#allocation8 + $0x10] sm:$0xf]
    %v180 = vld [vmem:[#allocation8 + $0x14] sm:$0xf]
    %v181 = vld [vmem:[#allocation8 + $0x18] sm:$0xf]
    %v182 = vld [vmem:[#allocation8 + $0x1c] sm:$0xf]
    %v183 = vld [vmem:[#allocation8 + $0x20] sm:$0xf]
    %v184 = vld [vmem:[#allocation8 + $0x24] sm:$0xf]
    %v185 = vld [vmem:[#allocation8 + $0x28] sm:$0xf]
    %v186 = vld [vmem:[#allocation8 + $0x2c] sm:$0xf]
    %v187 = vld [vmem:[#allocation8 + $0x30] sm:$0xf]
    %v188 = vld [vmem:[#allocation8 + $0x34] sm:$0xf]
    %v189 = vld [vmem:[#allocation8 + $0x38] sm:$0xf]
    %v190 = vld [vmem:[#allocation8 + $0x3c] sm:$0xf]
    %v191 = vld [vmem:[#allocation10] sm:$0x1]
    %v192 = vperm.slane %v191, 0
    %v209 = vunpack.c.l.b16 %v175
    %v210 = vunpack.c.l.b16 %v176
    %v211 = vunpack.c.l.b16 %v177
    %v212 = vunpack.c.l.b16 %v178
    %v213 = vunpack.c.l.b16 %v179
    %v214 = vunpack.c.l.b16 %v180
    %v215 = vunpack.c.l.b16 %v181
    %v216 = vunpack.c.l.b16 %v182
    %v217 = vunpack.c.l.b16 %v183
    %v218 = vunpack.c.l.b16 %v184
    %v219 = vunpack.c.l.b16 %v185
    %v220 = vunpack.c.l.b16 %v186
    %v221 = vunpack.c.l.b16 %v187
    %v222 = vunpack.c.l.b16 %v188
    %v223 = vunpack.c.l.b16 %v189
    %v224 = vunpack.c.l.b16 %v190
    %v225 = vpack.c.b16 %v210, %v209
    %v226 = vpack.c.b16 %v212, %v211
    %v227 = vpack.c.b16 %v214, %v213
    %v228 = vpack.c.b16 %v216, %v215
    %v229 = vpack.c.b16 %v218, %v217
    %v230 = vpack.c.b16 %v220, %v219
    %v231 = vpack.c.b16 %v222, %v221
    %v232 = vpack.c.b16 %v224, %v223
    %241 = vmatpush.bf16.msra.mxu0 %v232
    %242 = vmatpush.bf16.msra.mxu0 %v231
    %243 = vmatpush.bf16.msra.mxu0 %v230
    %244 = vmatpush.bf16.msra.mxu0 %v229
    %245 = vmatpush.bf16.msra.mxu0 %v228
    %246 = vmatpush.bf16.msra.mxu0 %v227
    %247 = vmatpush.bf16.msra.mxu0 %v226
    %248 = vmatpush.bf16.msra.mxu0 %v225
    %249 = vmatmul.bf16.gmra.mxu0 %v174
    %v250 = vpop.f32.mrf.mxu0
    %v251 = vadd.f32 %v192, %v250
    %v252 = vpop.f32.mrf.mxu0
    %253 = vdwg.mxu0
    %v254 = vmax.f32 %v251, 0.0
    %255 = vst [vmem:[#allocation11] sm:$0xff] %v254
    // Predicated region
    $region42: #{tpu_custom_call.1} parent=1 // pred_check
      _
    $region43: #{tpu_custom_call.1} parent=1 // pred_check_branch
      %257 = sbr.rel (0) target = $region45
    $region44: #{tpu_custom_call.1} parent=1 // pred_region
      %259 = vsyncadd [#allocation4], 0
      %s261 = sshll.u32 [#allocation11], 4
      %s262 = int_to_ptr.vmem [resolvable:$true] %s261
      %s263 = sshll.u32 %s5, 4
      %s264 = int_to_ptr.hbm [resolvable:$true] %s263
      %266 = dma.vmem_to_hbm [thread:$0]  %s262, 128, %s264, [#allocation4]
    $region45: #{tpu_custom_call.1} parent=1 // pred_fallthru
      _
    // Predicated region
    $region46: #{tpu_custom_call.1} parent=1 // pred_check
      _
    $region47: #{tpu_custom_call.1} parent=1 // pred_check_branch
      %268 = sbr.rel (0) target = $region49
    $region48: #{tpu_custom_call.1} parent=1 // pred_region
      %270 = dma.done [#allocation4], 128
    $region49: #{tpu_custom_call.1} parent=1 // pred_fallthru
      _
    %271 = vsyncpa [#allocation3], 1
    %272 = vsyncpa [#allocation6], 1
    %273 = vsyncpa [#allocation9], 1
    %274 = vsyncpa [#allocation4], 1

</llo_original>
